<compile_context>
chip_gen: v7x
topology: tpu7x:2x2x1
jax: 0.10.0
libtpu: 0.0.40
codegen_flags: <defaults>
</compile_context>

<pallas_src>
import jax
import jax.numpy as jnp
from jax.experimental import pallas as pl
from jax.experimental.pallas import tpu as pltpu

STABILITY_LOSS_WEIGHT = 0.1  # module default


# --------------------------------------------------------------------------- kernel
def _make_kernel(num_chunks: int, stability_weight: float, exact_eps: bool):
    """Per-batch-tile kernel.

    Refs: final_logits [tB, C], labels [tB, 1] (int32, -1 => padded row),
    `num_chunks` chunk-logit refs [tB, C], out [1, 1] (SMEM).
    Writes the tile-local sum of
        CE_i + stability_weight/(T-1) * sum_pairs KL_i(prev || curr)
    The wrapper sums partials and divides by the (unpadded) batch size B once.
    """
    coeff = (stability_weight / (num_chunks - 1)) if num_chunks > 1 else 0.0

    def kernel(final_ref, labels_ref, *rest):
        chunk_refs = rest[:num_chunks]
        out_ref = rest[num_chunks]

        labels = labels_ref[...]                                      # [tB,1] int32
        valid = (labels >= 0).astype(jnp.float32)                     # [tB,1] row mask

        # ---- main cross-entropy, accumulated row-wise -----------------------
        logits = final_ref[...].astype(jnp.float32)                   # [tB,C]
        tB, C = logits.shape
        m = jnp.max(logits, axis=-1, keepdims=True)
        lse = jnp.log(jnp.sum(jnp.exp(logits - m), axis=-1, keepdims=True)) + m
        cls_ids = jax.lax.broadcasted_iota(jnp.int32, (tB, C), 1)
        # target logit per row without materializing an f32 one-hot
        tgt = jnp.sum(jnp.where(cls_ids == labels, logits, 0.0),
                      axis=-1, keepdims=True)                         # [tB,1]
        rows = lse - tgt                                              # CE per row

        # ---- stability loss: KL between consecutive chunk softmaxes ---------
        if num_chunks > 1 and stability_weight > 0.0:
            kl_rows = jnp.zeros((tB, 1), jnp.float32)
            prev_sh = prev_ex = prev_s = prev_log_s = None
            for t in range(num_chunks):            # T is small & static -> unrolled
                x = chunk_refs[t][...].astype(jnp.float32)            # [tB,C]
                mx = jnp.max(x, axis=-1, keepdims=True)
                sh = x - mx                                            # shifted logits
                ex = jnp.exp(sh)                                       # one exp/elem
                s = jnp.sum(ex, axis=-1, keepdims=True)                # [tB,1]
                log_s = jnp.log(s)                                     # one log/row
                if t > 0:
                    if exact_eps:
                        # strict PyTorch parity: log(softmax(curr) + 1e-8) per element
                        curr_probs = ex * (1.0 / s)                    # row-reciprocal
                        d = (prev_sh - prev_log_s) - jnp.log(curr_probs + 1e-8)
                        kl_rows = kl_rows + jnp.sum(prev_ex * d, axis=-1,
                                                    keepdims=True) / prev_s
                    else:
                        # log-softmax identity (fast path): no per-element log/divide.
                        #   sum_c p_prev*(logp_prev - logp_curr)
                        # = (1/s_prev) * sum_c e_prev*(sh_prev - sh_curr)
                        #   + (log s_curr - log s_prev)
                        # Differs from the +1e-8 form only where softmax(curr) < 1e-8.
                        num = jnp.sum(prev_ex * (prev_sh - sh), axis=-1, keepdims=True)
                        kl_rows = kl_rows + num / prev_s + (log_s - prev_log_s)
                prev_sh, prev_ex, prev_s, prev_log_s = sh, ex, s, log_s
            rows = rows + jnp.float32(coeff) * kl_rows

        # single scalar cross-sublane reduce per tile (padded rows masked out)
        out_ref[0, 0] = jnp.sum(rows * valid)

    return kernel


# --------------------------------------------------------------------------- sizing
def _vmem_budget():
    """Per-generation (v5e/v6e: 128 MiB, v7x: 64 MiB) VMEM limit + per-step budget."""
    try:
        cap = int(pltpu.get_tpu_info().vmem_capacity_bytes)
    except Exception:
        cap = 64 * 1024 * 1024                       # conservative: safe on v7x too
    vmem_limit = min((cap * 3) // 4, 96 * 1024 * 1024)       # 96 MiB (v5e/v6e), 48 MiB (v7x)
    step_budget = max(8 * 1024 * 1024, vmem_limit - 8 * 1024 * 1024)
    return step_budget, vmem_limit


def _largest_divisor_leq(n: int, cap: int) -> int:
    """Largest divisor of n that is <= cap (cap >= 1)."""
    best = 1
    i = 1
    while i * i <= n:
        if n % i == 0:
            for d in (i, n // i):
                if best < d <= cap:
                    best = d
        i += 1
    return best


def _pick_tile_b(padded_B, C, T, itemsize, step_budget, max_tile_b=None):
    """Largest batch tile (multiple of 8, dividing padded_B) whose per-step footprint
    (double-buffered native-dtype inputs + in-kernel f32 working set) fits the budget."""
    work_rows = 6 if T > 1 else 3                    # live [tile_b, C] f32 temporaries
    bytes_per_row = 2 * ((T + 1) * C * itemsize + 4) + work_rows * C * 4
    cap = max(8, step_budget // bytes_per_row)
    if max_tile_b is not None:
        cap = min(cap, max(8, int(max_tile_b)))
    if padded_B >= 16:
        cap = min(cap, padded_B // 2)                # >=2 grid steps: pipelining + v7x 2 TCs
    cap = max(8, (cap // 8) * 8)
    tile_b = 8 * _largest_divisor_leq(padded_B // 8, cap // 8)
    return tile_b, bytes_per_row * tile_b


# --------------------------------------------------------------------------- wrapper
def final_prediction_loss(final_output, labels, all_outputs=None,
                          stability_weight=STABILITY_LOSS_WEIGHT,
                          max_tile_b=None, exact_eps=False):
    """JAX wrapper mirroring FinalPredictionLoss.forward.

    final_output: [B, C] logits (any float dtype; upcast in-kernel)
    labels:       [B] int class indices
    all_outputs:  optional list of [B, C] per-chunk logits
    exact_eps:    True -> bit-for-bit PyTorch `log(softmax(curr)+1e-8)`; False (default)
                  -> log-softmax fast path (differs only where softmax(curr) < 1e-8).
    Returns scalar float32 loss.
    """
    final_output = jnp.asarray(final_output)
    labels = jnp.asarray(labels)
    B, C = final_output.shape

    use_stability = (all_outputs is not None and len(all_outputs) > 1
                     and stability_weight > 0)
    chunks = [jnp.asarray(o) for o in all_outputs] if use_stability else []
    T = len(chunks)

    itemsize = jnp.dtype(final_output.dtype).itemsize
    for c in chunks:
        itemsize = max(itemsize, jnp.dtype(c.dtype).itemsize)

    # Pad batch to a multiple of 8; padded rows get label = -1 and are masked in-kernel,
    # so the mean-over-B semantics are preserved exactly (never a full-batch fallback).
    padded_B = ((B + 7) // 8) * 8
    pad = padded_B - B
    labels_2d = labels.reshape(B, 1).astype(jnp.int32)
    if pad:
        final_output = jnp.pad(final_output, ((0, pad), (0, 0)))
        labels_2d = jnp.pad(labels_2d, ((0, pad), (0, 0)), constant_values=-1)
        chunks = [jnp.pad(c, ((0, pad), (0, 0))) for c in chunks]

    step_budget, vmem_limit = _vmem_budget()
    tile_b, est_step_bytes = _pick_tile_b(padded_B, C, T, itemsize,
                                          step_budget, max_tile_b)
    assert padded_B % tile_b == 0 and tile_b % 8 == 0, (padded_B, tile_b)
    if est_step_bytes > vmem_limit:
        # TODO(synk): add an inner ("arbitrary") grid axis over C with online logsumexp
        # accumulators for vocab-scale num_classes; single-row class blocks don't fit VMEM.
        raise NotImplementedError(
            f"num_classes={C} too large for a VMEM-resident class row "
            f"({est_step_bytes} B/step > {vmem_limit} B); class-axis tiling not implemented.")
    num_tiles = padded_B // tile_b

    logit_spec = pl.BlockSpec((tile_b, C), lambda i: (i, 0))
    label_spec = pl.BlockSpec((tile_b, 1), lambda i: (i, 0))
    in_specs = [logit_spec, label_spec] + [logit_spec] * T
    out_spec = pl.BlockSpec((1, 1), lambda i: (i, 0),
                            memory_space=pltpu.MemorySpace.SMEM)

    elems = padded_B * C
    n_pairs = max(T - 1, 0)
    cost = pl.CostEstimate(
        flops=int((6 * (T + 1) + 4 * n_pairs) * elems),
        transcendentals=int((T + 1) * elems
                            + (n_pairs * elems if (exact_eps and T > 1) else 0)
                            + padded_B * (T + 2)),
        bytes_accessed=int((T + 1) * elems * itemsize + padded_B * 4 + num_tiles * 4),
    )

    partials = pl.pallas_call(
        _make_kernel(T, float(stability_weight), bool(exact_eps)),
        out_shape=jax.ShapeDtypeStruct((num_tiles, 1), jnp.float32),
        grid=(num_tiles,),
        in_specs=in_specs,
        out_specs=out_spec,
        compiler_params=pltpu.CompilerParams(
            dimension_semantics=("parallel",),          # batch tiles are independent
            vmem_limit_bytes=int(vmem_limit),
        ),
        cost_estimate=cost,
    )(final_output, labels_2d, *chunks)

    # finalize: divide the full-batch sums by the ORIGINAL B once (mean semantics)
    return jnp.sum(partials) / jnp.float32(B)


# --------------------------------------------------------------------------- reference
def _reference_loss(final_output, labels, all_outputs, stability_weight):
    """Pure-JAX reference (same math as the PyTorch module)."""
    f = jnp.asarray(final_output).astype(jnp.float32)
    log_probs = jax.nn.log_softmax(f, axis=-1)
    B = f.shape[0]
    main = -jnp.mean(log_probs[jnp.arange(B), labels])
    total = main
    if all_outputs is not None and len(all_outputs) > 1 and stability_weight > 0:
        stab = 0.0
        for i in range(1, len(all_outputs)):
            prev_l = jnp.asarray(all_outputs[i - 1]).astype(jnp.float32)
            curr_l = jnp.asarray(all_outputs[i]).astype(jnp.float32)
            prev = jax.nn.softmax(prev_l, axis=-1)
            curr = jax.nn.softmax(curr_l, axis=-1)
            log_prev = jax.nn.log_softmax(prev_l, axis=-1)
            kl = jnp.sum(prev * (log_prev - jnp.log(curr + 1e-8))) / B
            stab = stab + kl
        stab = stab / (len(all_outputs) - 1)
        total = main + stability_weight * stab
    return total


if __name__ == "__main__":
    key = jax.random.PRNGKey(0)
    B, C, T = 8, 16, 3  # batch, num_classes, num_chunks

    k1, k2, k3 = jax.random.split(key, 3)
    final_output = jax.random.normal(k1, (B, C), dtype=jnp.float32)
    labels = jax.random.randint(k2, (B,), 0, C, dtype=jnp.int32)
    all_outputs = [jax.random.normal(jax.random.fold_in(k3, t), (B, C), dtype=jnp.float32)
                   for t in range(T)]

    ref = _reference_loss(final_output, labels, all_outputs, STABILITY_LOSS_WEIGHT)

    # fast path (log-softmax identity for the current chunk)
    loss = jax.block_until_ready(final_prediction_loss(final_output, labels, all_outputs))
    assert jnp.allclose(loss, ref, rtol=1e-5, atol=2e-5), (loss, ref)

    # strict PyTorch-parity epsilon path
    loss_exact = jax.block_until_ready(
        final_prediction_loss(final_output, labels, all_outputs, exact_eps=True))
    assert jnp.allclose(loss_exact, ref, rtol=1e-5, atol=1e-5), (loss_exact, ref)

    # Multi-tile grid path (forced 8-row tiles -> 2 batch tiles on the "parallel" axis).
    B2 = 16
    k4, k5, k6 = jax.random.split(jax.random.PRNGKey(1), 3)
    fo2 = jax.random.normal(k4, (B2, C), dtype=jnp.float32)
    lb2 = jax.random.randint(k5, (B2,), 0, C, dtype=jnp.int32)
    ao2 = [jax.random.normal(jax.random.fold_in(k6, t), (B2, C), dtype=jnp.float32)
           for t in range(T)]
    loss2 = jax.block_until_ready(final_prediction_loss(fo2, lb2, ao2, max_tile_b=8))
    ref2 = _reference_loss(fo2, lb2, ao2, STABILITY_LOSS_WEIGHT)
    assert jnp.allclose(loss2, ref2, rtol=1e-5, atol=2e-5), (loss2, ref2)

    # Native bf16 inputs: no wrapper-side f32 cast, upcast happens in-register.
    fo3 = fo2.astype(jnp.bfloat16)
    ao3 = [a.astype(jnp.bfloat16) for a in ao2]
    loss3 = jax.block_until_ready(final_prediction_loss(fo3, lb2, ao3, max_tile_b=8))
    ref3 = _reference_loss(fo3, lb2, ao3, STABILITY_LOSS_WEIGHT)
    assert jnp.allclose(loss3, ref3, rtol=1e-4, atol=1e-4), (loss3, ref3)

    # Ragged batch (B not a multiple of 8): padded + masked rows, still exact mean over B.
    B4 = 10
    k7, k8, k9 = jax.random.split(jax.random.PRNGKey(2), 3)
    fo4 = jax.random.normal(k7, (B4, C), dtype=jnp.float32)
    lb4 = jax.random.randint(k8, (B4,), 0, C, dtype=jnp.int32)
    ao4 = [jax.random.normal(jax.random.fold_in(k9, t), (B4, C), dtype=jnp.float32)
           for t in range(T)]
    loss4 = jax.block_until_ready(final_prediction_loss(fo4, lb4, ao4))
    ref4 = _reference_loss(fo4, lb4, ao4, STABILITY_LOSS_WEIGHT)
    assert jnp.allclose(loss4, ref4, rtol=1e-5, atol=2e-5), (loss4, ref4)

    # CE-only path (no stability term).
    loss_ce = jax.block_until_ready(final_prediction_loss(final_output, labels, None))
    ref_ce = _reference_loss(final_output, labels, None, STABILITY_LOSS_WEIGHT)
    assert jnp.allclose(loss_ce, ref_ce, rtol=1e-5, atol=1e-5), (loss_ce, ref_ce)

    print("KERNEL_OK")
</pallas_src>

<mosaic_0001>
module attributes {stable_mosaic.version = 11 : i64} {
  func.func @kernel(%arg0: i32, %arg1: memref<8x16xf32, #tpu.memory_space<vmem>>, %arg2: memref<8x1xi32, #tpu.memory_space<vmem>>, %arg3: memref<8x16xf32, #tpu.memory_space<vmem>>, %arg4: memref<8x16xf32, #tpu.memory_space<vmem>>, %arg5: memref<8x16xf32, #tpu.memory_space<vmem>>, %arg6: memref<1x1xf32, #tpu.memory_space<smem>>) attributes {dimension_semantics = [#tpu.dimension_semantics<parallel>], iteration_bounds = array<i64: 1>, scalar_prefetch = 0 : i64, scratch_operands = 0 : i64, tpu.core_type = #tpu.core_type<tc>, window_params = [{transform_indices = @transform_0, window_bounds = array<i64: 8, 16>}, {transform_indices = @transform_1, window_bounds = array<i64: 8, 1>}, {transform_indices = @transform_2, window_bounds = array<i64: 8, 16>}, {transform_indices = @transform_3, window_bounds = array<i64: 8, 16>}, {transform_indices = @transform_4, window_bounds = array<i64: 8, 16>}, {transform_indices = @transform_5, window_bounds = array<i64: 1, 1>}]} {
    %c0 = arith.constant 0 : index
    %c0_0 = arith.constant 0 : index
    %0 = vector.load %arg2[%c0, %c0_0] : memref<8x1xi32, #tpu.memory_space<vmem>>, vector<8x1xi32>
    %c0_i32 = arith.constant 0 : i32
    %1 = vector.broadcast %c0_i32 : i32 to vector<8x1xi32>
    %2 = arith.cmpi sge, %0, %1 : vector<8x1xi32>
    %3 = arith.extui %2 : vector<8x1xi1> to vector<8x1xi32>
    %4 = arith.sitofp %3 : vector<8x1xi32> to vector<8x1xf32>
    %c0_1 = arith.constant 0 : index
    %c0_2 = arith.constant 0 : index
    %5 = vector.load %arg1[%c0_1, %c0_2] : memref<8x16xf32, #tpu.memory_space<vmem>>, vector<8x16xf32>
    %cst = arith.constant dense<0xFF800000> : vector<8xf32>
    %6 = vector.multi_reduction <maximumf>, %5, %cst [1] : vector<8x16xf32> to vector<8xf32>
    %7 = vector.shape_cast %6 : vector<8xf32> to vector<8x1xf32>
    %8 = vector.broadcast %7 : vector<8x1xf32> to vector<8x16xf32>
    %9 = arith.subf %5, %8 : vector<8x16xf32>
    %10 = math.exp %9 : vector<8x16xf32>
    %cst_3 = arith.constant dense<0.000000e+00> : vector<8xf32>
    %11 = vector.multi_reduction <add>, %10, %cst_3 [1] : vector<8x16xf32> to vector<8xf32>
    %12 = vector.shape_cast %11 : vector<8xf32> to vector<8x1xf32>
    %13 = math.log %12 : vector<8x1xf32>
    %14 = arith.addf %13, %7 : vector<8x1xf32>
    %15 = tpu.iota {dimensions = array<i32: 1>} : vector<8x16xi32>
    %16 = vector.broadcast %0 : vector<8x1xi32> to vector<8x16xi32>
    %17 = arith.cmpi eq, %15, %16 : vector<8x16xi32>
    %cst_4 = arith.constant 0.000000e+00 : f32
    %18 = vector.broadcast %cst_4 : f32 to vector<8x16xf32>
    %19 = arith.select %17, %5, %18 : vector<8x16xi1>, vector<8x16xf32>
    %cst_5 = arith.constant dense<0.000000e+00> : vector<8xf32>
    %20 = vector.multi_reduction <add>, %19, %cst_5 [1] : vector<8x16xf32> to vector<8xf32>
    %21 = vector.shape_cast %20 : vector<8xf32> to vector<8x1xf32>
    %22 = arith.subf %14, %21 : vector<8x1xf32>
    %cst_6 = arith.constant 0.000000e+00 : f32
    %23 = vector.broadcast %cst_6 : f32 to vector<8x1xf32>
    %c0_7 = arith.constant 0 : index
    %c0_8 = arith.constant 0 : index
    %24 = vector.load %arg3[%c0_7, %c0_8] : memref<8x16xf32, #tpu.memory_space<vmem>>, vector<8x16xf32>
    %cst_9 = arith.constant dense<0xFF800000> : vector<8xf32>
    %25 = vector.multi_reduction <maximumf>, %24, %cst_9 [1] : vector<8x16xf32> to vector<8xf32>
    %26 = vector.shape_cast %25 : vector<8xf32> to vector<8x1xf32>
    %27 = vector.broadcast %26 : vector<8x1xf32> to vector<8x16xf32>
    %28 = arith.subf %24, %27 : vector<8x16xf32>
    %29 = math.exp %28 : vector<8x16xf32>
    %cst_10 = arith.constant dense<0.000000e+00> : vector<8xf32>
    %30 = vector.multi_reduction <add>, %29, %cst_10 [1] : vector<8x16xf32> to vector<8xf32>
    %31 = vector.shape_cast %30 : vector<8xf32> to vector<8x1xf32>
    %32 = math.log %31 : vector<8x1xf32>
    %c0_11 = arith.constant 0 : index
    %c0_12 = arith.constant 0 : index
    %33 = vector.load %arg4[%c0_11, %c0_12] : memref<8x16xf32, #tpu.memory_space<vmem>>, vector<8x16xf32>
    %cst_13 = arith.constant dense<0xFF800000> : vector<8xf32>
    %34 = vector.multi_reduction <maximumf>, %33, %cst_13 [1] : vector<8x16xf32> to vector<8xf32>
    %35 = vector.shape_cast %34 : vector<8xf32> to vector<8x1xf32>
    %36 = vector.broadcast %35 : vector<8x1xf32> to vector<8x16xf32>
    %37 = arith.subf %33, %36 : vector<8x16xf32>
    %38 = math.exp %37 : vector<8x16xf32>
    %cst_14 = arith.constant dense<0.000000e+00> : vector<8xf32>
    %39 = vector.multi_reduction <add>, %38, %cst_14 [1] : vector<8x16xf32> to vector<8xf32>
    %40 = vector.shape_cast %39 : vector<8xf32> to vector<8x1xf32>
    %41 = math.log %40 : vector<8x1xf32>
    %42 = arith.subf %28, %37 : vector<8x16xf32>
    %43 = arith.mulf %29, %42 : vector<8x16xf32>
    %cst_15 = arith.constant dense<0.000000e+00> : vector<8xf32>
    %44 = vector.multi_reduction <add>, %43, %cst_15 [1] : vector<8x16xf32> to vector<8xf32>
    %45 = vector.shape_cast %44 : vector<8xf32> to vector<8x1xf32>
    %46 = arith.divf %45, %31 : vector<8x1xf32>
    %47 = arith.addf %23, %46 : vector<8x1xf32>
    %48 = arith.subf %41, %32 : vector<8x1xf32>
    %49 = arith.addf %47, %48 : vector<8x1xf32>
    %c0_16 = arith.constant 0 : index
    %c0_17 = arith.constant 0 : index
    %50 = vector.load %arg5[%c0_16, %c0_17] : memref<8x16xf32, #tpu.memory_space<vmem>>, vector<8x16xf32>
    %cst_18 = arith.constant dense<0xFF800000> : vector<8xf32>
    %51 = vector.multi_reduction <maximumf>, %50, %cst_18 [1] : vector<8x16xf32> to vector<8xf32>
    %52 = vector.shape_cast %51 : vector<8xf32> to vector<8x1xf32>
    %53 = vector.broadcast %52 : vector<8x1xf32> to vector<8x16xf32>
    %54 = arith.subf %50, %53 : vector<8x16xf32>
    %55 = math.exp %54 : vector<8x16xf32>
    %cst_19 = arith.constant dense<0.000000e+00> : vector<8xf32>
    %56 = vector.multi_reduction <add>, %55, %cst_19 [1] : vector<8x16xf32> to vector<8xf32>
    %57 = vector.shape_cast %56 : vector<8xf32> to vector<8x1xf32>
    %58 = math.log %57 : vector<8x1xf32>
    %59 = arith.subf %37, %54 : vector<8x16xf32>
    %60 = arith.mulf %38, %59 : vector<8x16xf32>
    %cst_20 = arith.constant dense<0.000000e+00> : vector<8xf32>
    %61 = vector.multi_reduction <add>, %60, %cst_20 [1] : vector<8x16xf32> to vector<8xf32>
    %62 = vector.shape_cast %61 : vector<8xf32> to vector<8x1xf32>
    %63 = arith.divf %62, %40 : vector<8x1xf32>
    %64 = arith.addf %49, %63 : vector<8x1xf32>
    %65 = arith.subf %58, %41 : vector<8x1xf32>
    %66 = arith.addf %64, %65 : vector<8x1xf32>
    %cst_21 = arith.constant 5.000000e-02 : f32
    %67 = vector.broadcast %cst_21 : f32 to vector<8x1xf32>
    %68 = arith.mulf %67, %66 : vector<8x1xf32>
    %69 = arith.addf %22, %68 : vector<8x1xf32>
    %70 = arith.mulf %69, %4 : vector<8x1xf32>
    %71 = vector.shape_cast %70 : vector<8x1xf32> to vector<1x8x1xf32>
    %cst_22 = arith.constant dense<0.000000e+00> : vector<1xf32>
    %72 = vector.multi_reduction <add>, %71, %cst_22 [1, 2] : vector<1x8x1xf32> to vector<1xf32>
    %73 = vector.shape_cast %72 : vector<1xf32> to vector<1x1x1xf32>
    %74 = vector.extract %73[0, 0, 0] : f32 from vector<1x1x1xf32>
    %c0_23 = arith.constant 0 : index
    %c0_24 = arith.constant 0 : index
    %75 = memref.load %arg6[%c0_23, %c0_24] : memref<1x1xf32, #tpu.memory_space<smem>>
    memref.store %74, %arg6[%c0_23, %c0_24] : memref<1x1xf32, #tpu.memory_space<smem>>
    return
  }
  func.func @transform_0(%arg0: i32) -> (i32, i32) {
    %c0_i32 = arith.constant 0 : i32
    %c0_i32_0 = arith.constant 0 : i32
    return %arg0, %c0_i32 : i32, i32
  }
  func.func @transform_1(%arg0: i32) -> (i32, i32) {
    %c0_i32 = arith.constant 0 : i32
    %c0_i32_0 = arith.constant 0 : i32
    return %arg0, %c0_i32 : i32, i32
  }
  func.func @transform_2(%arg0: i32) -> (i32, i32) {
    %c0_i32 = arith.constant 0 : i32
    %c0_i32_0 = arith.constant 0 : i32
    return %arg0, %c0_i32 : i32, i32
  }
  func.func @transform_3(%arg0: i32) -> (i32, i32) {
    %c0_i32 = arith.constant 0 : i32
    %c0_i32_0 = arith.constant 0 : i32
    return %arg0, %c0_i32 : i32, i32
  }
  func.func @transform_4(%arg0: i32) -> (i32, i32) {
    %c0_i32 = arith.constant 0 : i32
    %c0_i32_0 = arith.constant 0 : i32
    return %arg0, %c0_i32 : i32, i32
  }
  func.func @transform_5(%arg0: i32) -> (i32, i32) {
    %c0_i32 = arith.constant 0 : i32
    %c0_i32_0 = arith.constant 0 : i32
    return %arg0, %c0_i32 : i32, i32
  }
}

</mosaic_0001>

<llo_original>
// kernel: tpu_custom_call.1
$region0: #{tpu_custom_call.1}
  #allocation0 [shape = 'u32[]', space=smem, size = 0x4, offset = 0x4, fixed_abs, tag = 'smem constant byte address 0x4 - core index']
  #allocation1 [shape = 'u32[144,128]{1,0:T(1,128)}', space=vmem, size = 0x12000, scoped, tag = 'internal scratch']
  %s0 = inlined_call_operand.vmem [shape: f32[8,16], index: 0, kind: input, shape index: {}]
  %s1 = inlined_call_operand.vmem [shape: s32[8,1], index: 1, kind: input, shape index: {}]
  %s2 = inlined_call_operand.vmem [shape: f32[8,16], index: 2, kind: input, shape index: {}]
  %s3 = inlined_call_operand.hbm [shape: f32[8,16], index: 3, kind: input, shape index: {}]
  %s4 = inlined_call_operand.vmem [shape: f32[8,16], index: 4, kind: input, shape index: {}]
  %s5 = inlined_call_operand.hbm [shape: f32[1,1], index: 5, kind: output, shape index: {}]
  %s6 = sld [smem:[#allocation0]]
  $region34: #{tpu_custom_call.1} parent=0
    _
  %s8 = ssub.s32 1, %s6
  %s9 = scalar_select 0, %s8, %s6
  $region1: #{tpu_custom_call.1} parent=0
    #allocation2 [shape = 'u8[4096]{0}', space=vmem, size = 0x1000, scoped, tag = 'input window, operand 3, single buffered']
    #allocation3 [shape = 's32[1]{0}', space=sflag, size = 0x4, scoped, tag = 'scoped memory for tpu_custom_call.1']
    #allocation4 [shape = 's32[1]{0}', space=sflag, size = 0x4, scoped, tag = 'scoped memory for tpu_custom_call.1']
    #allocation5 [shape = 'u8[512]{0}', space=smem, size = 0x200, scoped, tag = 'output window, operand 0, single buffered']
    %10 = vsyncpa [#allocation3], 0
    %11 = vsyncpa [#allocation4], 0
    // Predicated region
    $region2: #{tpu_custom_call.1} parent=1 // pred_check
      _
    $region3: #{tpu_custom_call.1} parent=1 // pred_check_branch
      %13 = sbr.rel (0) target = $region5
    $region4: #{tpu_custom_call.1} parent=1 // pred_region
      _
    $region5: #{tpu_custom_call.1} parent=1 // pred_fallthru
      _
    // Predicated region
    $region6: #{tpu_custom_call.1} parent=1 // pred_check
      _
    $region7: #{tpu_custom_call.1} parent=1 // pred_check_branch
      %15 = sbr.rel (0) target = $region9
    $region8: #{tpu_custom_call.1} parent=1 // pred_region
      _
    $region9: #{tpu_custom_call.1} parent=1 // pred_fallthru
      _
    // Predicated region
    $region10: #{tpu_custom_call.1} parent=1 // pred_check
      _
    $region11: #{tpu_custom_call.1} parent=1 // pred_check_branch
      %17 = sbr.rel (0) target = $region13
    $region12: #{tpu_custom_call.1} parent=1 // pred_region
      _
    $region13: #{tpu_custom_call.1} parent=1 // pred_fallthru
      _
    // Predicated region
    $region14: #{tpu_custom_call.1} parent=1 // pred_check
      _
    $region15: #{tpu_custom_call.1} parent=1 // pred_check_branch
      %19 = sbr.rel (0) target = $region17
    $region16: #{tpu_custom_call.1} parent=1 // pred_region
      %s21 = ssub.s32 128, 128
      %22 = vsyncadd [#allocation3], %s21
      %s24 = sshll.u32 [#allocation2], 4
      %s25 = int_to_ptr.vmem [resolvable:$true] %s24
      %27 = dma.hbm_to_vmem [thread:$0]  %s3, 128, %s25, [#allocation3]
    $region17: #{tpu_custom_call.1} parent=1 // pred_fallthru
      _
    // Predicated region
    $region18: #{tpu_custom_call.1} parent=1 // pred_check
      _
    $region19: #{tpu_custom_call.1} parent=1 // pred_check_branch
      %29 = sbr.rel (0) target = $region21
    $region20: #{tpu_custom_call.1} parent=1 // pred_region
      _
    $region21: #{tpu_custom_call.1} parent=1 // pred_fallthru
      _
    // Predicated region
    $region22: #{tpu_custom_call.1} parent=1 // pred_check
      _
    $region23: #{tpu_custom_call.1} parent=1 // pred_check_branch
      %31 = sbr.rel (0) target = $region25
    $region24: #{tpu_custom_call.1} parent=1 // pred_region
      %32 = dma.done [#allocation3], 128
    $region25: #{tpu_custom_call.1} parent=1 // pred_fallthru
      _
    %v33 = vld [vmem:[%s1] sm:$0xff]
    %vm34 = vcmp.ge.s32.totalorder %v33, 0
    %v35 = vsel %vm34, 1, 0
    %v36 = vcvt.s32.f32 %v35
    %v37 = vld [vmem:[%s0] sm:$0xff]
    %vm38 = vcmask 130048
    %v39 = vsel %vm38, %v37, -inf
    %40 = vmax.xlane.f32.xlu0 %v39
    %v41 = vpop.xlane.xlu0 %40
    %v42 = vsub.f32 %v37, %v41
    %v43 = vmul.f32 %v42, 1.442695
    %v44 = vpow.pop %v43
    %v45 = vsel %vm38, %v44, 0.0
    %46 = vadd.xlane.f32.xlu0 %v45
    %v47 = vpop.xlane.xlu0 %46
    %v48 = vlog2.pop %v47
    %v49 = vmul.f32 %v48, 0.6931472
    %v50 = vadd.f32 %v49, %v41
    %v51 = vlaneseq
    %v52 = vand.u32 %v51, 127
    %53 = vset.pattern.permute.xlu0 0
    %54 = vperm.xlu0 %53, %v33
    %v55 = vpop.permute.xlu0 %54
    %vm56 = vcmp.eq.s32.totalorder %v52, %v55
    %v57 = vsel %vm56, %v37, 0.0
    %v58 = vsel %vm38, %v57, 0.0
    %59 = vadd.xlane.f32.xlu0 %v58
    %v60 = vpop.xlane.xlu0 %59
    %v61 = vsub.f32 %v50, %v60
    %v62 = vld [vmem:[%s2] sm:$0xff]
    %v63 = vsel %vm38, %v62, -inf
    %64 = vmax.xlane.f32.xlu0 %v63
    %v65 = vpop.xlane.xlu0 %64
    %v66 = vsub.f32 %v62, %v65
    %v67 = vmul.f32 %v66, 1.442695
    %v68 = vpow.pop %v67
    %v69 = vsel %vm38, %v68, 0.0
    %70 = vadd.xlane.f32.xlu0 %v69
    %v71 = vpop.xlane.xlu0 %70
    %v72 = vlog2.pop %v71
    %v73 = vmul.f32 %v72, 0.6931472
    %v74 = vld [vmem:[#allocation2] sm:$0xff]
    %v75 = vsel %vm38, %v74, -inf
    %76 = vmax.xlane.f32.xlu0 %v75
    %v77 = vpop.xlane.xlu0 %76
    %v78 = vsub.f32 %v74, %v77
    %v79 = vmul.f32 %v78, 1.442695
    %v80 = vpow.pop %v79
    %v81 = vsel %vm38, %v80, 0.0
    %82 = vadd.xlane.f32.xlu0 %v81
    %v83 = vpop.xlane.xlu0 %82
    %v84 = vlog2.pop %v83
    %v85 = vmul.f32 %v84, 0.6931472
    %v86 = vsub.f32 %v66, %v78
    %v87 = vmul.f32 %v68, %v86
    %v88 = vsel %vm38, %v87, 0.0
    %89 = vadd.xlane.f32.xlu0 %v88
    %v90 = vpop.xlane.xlu0 %89
    %v91 = vrcp.pop %v71
    %v92 = vmul.f32 %v90, %v91
    %v93 = vadd.f32 %v92, 0.0
    %v94 = vsub.f32 %v85, %v73
    %v95 = vadd.f32 %v93, %v94
    %v96 = vld [vmem:[%s4] sm:$0xff]
    %v97 = vsel %vm38, %v96, -inf
    %98 = vmax.xlane.f32.xlu0 %v97
    %v99 = vpop.xlane.xlu0 %98
    %v100 = vsub.f32 %v96, %v99
    %v101 = vmul.f32 %v100, 1.442695
    %v102 = vpow.pop %v101
    %v103 = vsel %vm38, %v102, 0.0
    %104 = vadd.xlane.f32.xlu0 %v103
    %v105 = vpop.xlane.xlu0 %104
    %v106 = vlog2.pop %v105
    %v107 = vmul.f32 %v106, 0.6931472
    %v108 = vsub.f32 %v78, %v100
    %v109 = vmul.f32 %v80, %v108
    %v110 = vsel %vm38, %v109, 0.0
    %111 = vadd.xlane.f32.xlu0 %v110
    %v112 = vpop.xlane.xlu0 %111
    %v113 = vrcp.pop %v83
    %v114 = vmul.f32 %v112, %v113
    %v115 = vadd.f32 %v95, %v114
    %v116 = vsub.f32 %v107, %v85
    %v117 = vadd.f32 %v115, %v116
    %v118 = vmul.f32 %v117, 0.05
    %v119 = vadd.f32 %v61, %v118
    %v120 = vmul.f32 %v119, %v36
    %vm121 = vcmask 7168
    %v122 = vsel %vm121, %v120, 0.0
    %123 = vadd.xlane.f32.xlu0 %v122
    %v124 = vpop.xlane.xlu0 %123
    %v125 = vrot.slane %v124, 4
    %v126 = vadd.f32 %v124, %v125
    %v127 = vrot.slane %v126, 2
    %v128 = vadd.f32 %v126, %v127
    %v129 = vrot.slane %v128, 1
    %v130 = vadd.f32 %v128, %v129
    %s131 = vtos %v130
    %s132 = scalar_lea.smem [#allocation5], 0
    %133 = sst [smem:[%s132]] %s131
    // Predicated region
    $region26: #{tpu_custom_call.1} parent=1 // pred_check
      _
    $region27: #{tpu_custom_call.1} parent=1 // pred_check_branch
      %135 = sbr.rel (0) target = $region29
    $region28: #{tpu_custom_call.1} parent=1 // pred_region
      %s137 = ssub.s32 16, 16
      %138 = vsyncadd [#allocation4], %s137
      %141 = dma.smem_to_hbm [#allocation5], 16, %s5, [#allocation4]
    $region29: #{tpu_custom_call.1} parent=1 // pred_fallthru
      _
    // Predicated region
    $region30: #{tpu_custom_call.1} parent=1 // pred_check
      _
    $region31: #{tpu_custom_call.1} parent=1 // pred_check_branch
      %143 = sbr.rel (0) target = $region33
    $region32: #{tpu_custom_call.1} parent=1 // pred_region
      %144 = dma.done [#allocation4], 16
    $region33: #{tpu_custom_call.1} parent=1 // pred_fallthru
      _
    %145 = sfence
    %146 = vsyncpa [#allocation3], 1
    %147 = vsyncpa [#allocation4], 1

</llo_original>
